<compile_context>
chip_gen: v5e
topology: v5e:2x2
jax: 0.10.0
libtpu: 0.0.40
codegen_flags: <defaults>
</compile_context>

<pallas_src>
import functools

import jax
import jax.numpy as jnp
from jax.experimental import pallas as pl
from jax.experimental.pallas import tpu as pltpu

LANES = 128            # vreg lane width
MAX_ROW_BLOCK = 4096   # rows per input tile -> 4096*128*4B = 2 MiB f32 tile
NUM_SPLITS = 2         # "parallel" grid axis: 2 TCs on v7x, harmless elsewhere


def _iou_kernel(o_ref, t_ref, part_ref, *, rows, row_block, steps, need_mask):
    """grid = (NUM_SPLITS, steps): axis 0 parallel (per core), axis 1 is the
    sequential reduction over row tiles.

    o_ref, t_ref : (row_block, LANES) VMEM tiles of logits / targets
    part_ref     : (1, 3, 8, LANES) VMEM output block, resident across axis 1.
                   Per-split per-lane partial sums of
                   [outputs*targets, outputs, targets]; reduced in the wrapper.
    """
    p = pl.program_id(0)
    i = pl.program_id(1)

    @pl.when(i == 0)
    def _init():
        part_ref[...] = jnp.zeros_like(part_ref)

    # sigmoid(x) > 0.5  <=>  x > 0  -- no transcendental needed.
    pred = o_ref[...] > 0
    t = t_ref[...].astype(jnp.float32)

    if need_mask:
        # Zero out rows outside the real array: the ragged last row-block and
        # any duplicated (clamped) block of the 2-way split.  Edge-block DMA
        # padding may be garbage, so mask via select (not multiply).
        blk = p * steps + i
        row_ids = jax.lax.broadcasted_iota(jnp.int32, (row_block, LANES), 0)
        valid = blk * row_block + row_ids < rows
        t = jnp.where(valid, t, 0.0)
        o = jnp.where(jnp.logical_and(pred, valid), 1.0, 0.0)
    else:
        o = pred.astype(jnp.float32)
    it = jnp.where(pred, t, 0.0)   # == o * t  (t already masked)

    # Per-lane partial accumulation: pure VPU adds in the hot loop; cross-lane
    # (XLU) reductions deferred to the wrapper epilogue.
    g = row_block // 8
    part_ref[0, 0] += it.reshape(g, 8, LANES).sum(axis=0)
    part_ref[0, 1] += o.reshape(g, 8, LANES).sum(axis=0)
    part_ref[0, 2] += t.reshape(g, 8, LANES).sum(axis=0)


def iou_loss(outputs, targets):
    """Pallas implementation of IoULoss.forward(outputs, targets)."""
    assert outputs.shape == targets.shape
    n = outputs.size

    o = outputs.reshape(-1)
    t = targets.reshape(-1)

    # Lane alignment. For typical NCHW tensors n % 128 == 0 and the reshape
    # below is a free bitcast (no HBM copy); the pad fallback (full copy) only
    # triggers for odd element counts.  Pad values are zeros -> pred False,
    # target 0 -> contribute nothing (matches PyTorch semantics exactly).
    rem = (-n) % LANES
    if rem:
        o = jnp.pad(o, (0, rem))
        t = jnp.pad(t, (0, rem))
    rows = o.size // LANES
    o2 = o.reshape(rows, LANES)
    t2 = t.reshape(rows, LANES)

    # Tiny inputs: pad rows up to one sublane group (negligible copy).
    if rows < 8:
        o2 = jnp.pad(o2, ((0, 8 - rows), (0, 0)))
        t2 = jnp.pad(t2, ((0, 8 - rows), (0, 0)))
        rows = 8

    row_block = min(MAX_ROW_BLOCK, (rows // 8) * 8)   # always a multiple of 8
    nblocks = pl.cdiv(rows, row_block)
    steps = pl.cdiv(nblocks, NUM_SPLITS)
    need_mask = (rows % row_block != 0) or (nblocks != NUM_SPLITS * steps)

    def in_map(p, i):
        # Clamp so the DMA never starts past the array; clamped duplicates and
        # ragged tails are masked inside the kernel.
        return (jnp.minimum(p * steps + i, nblocks - 1), 0)

    kernel = functools.partial(
        _iou_kernel, rows=rows, row_block=row_block, steps=steps,
        need_mask=need_mask)

    parts = pl.pallas_call(
        kernel,
        out_shape=jax.ShapeDtypeStruct((NUM_SPLITS, 3, 8, LANES), jnp.float32),
        grid_spec=pltpu.PrefetchScalarGridSpec(
            num_scalar_prefetch=0,
            grid=(NUM_SPLITS, steps),
            in_specs=[
                pl.BlockSpec((row_block, LANES), in_map),
                pl.BlockSpec((row_block, LANES), in_map),
            ],
            out_specs=pl.BlockSpec((1, 3, 8, LANES),
                                   lambda p, i: (p, 0, 0, 0)),
        ),
        compiler_params=pltpu.CompilerParams(
            dimension_semantics=("parallel", "arbitrary"),
            vmem_limit_bytes=32 << 20),
        cost_estimate=pl.CostEstimate(
            flops=6 * rows * LANES,
            transcendentals=0,
            bytes_accessed=o2.size * o2.dtype.itemsize
            + t2.size * t2.dtype.itemsize
            + NUM_SPLITS * 3 * 8 * LANES * 4),
    )(o2, t2)

    # Tiny epilogue (6 KiB): combine per-core / per-lane partials.
    sums = jnp.sum(parts, axis=(0, 2, 3))   # [intersection, sum_out, sum_tgt]
    inter, s_o, s_t = sums[0], sums[1], sums[2]
    union = s_o + s_t - inter
    return 1.0 - (inter + 1e-6) / (union + 1e-6)


def _iou_loss_ref(outputs, targets):
    o = jax.nn.sigmoid(outputs.astype(jnp.float32))
    o = (o > 0.5).astype(jnp.float32)
    t = targets.astype(jnp.float32)
    inter = jnp.sum(o * t)
    union = jnp.sum(o) + jnp.sum(t) - inter
    return 1.0 - (inter + 1e-6) / (union + 1e-6)


if __name__ == "__main__":
    key = jax.random.PRNGKey(0)
    k1, k2, k3, k4 = jax.random.split(key, 4)

    # Small NCHW shapes: batch=2, channels=4, spatial=16 (lane-aligned path).
    outputs = jax.random.normal(k1, (2, 4, 16, 16), dtype=jnp.float32)  # logits
    targets = (jax.random.uniform(k2, (2, 4, 16, 16)) > 0.5).astype(jnp.float32)
    loss = jax.block_until_ready(iou_loss(outputs, targets))
    ref = _iou_loss_ref(outputs, targets)
    assert jnp.allclose(loss, ref, atol=1e-5, rtol=1e-5), (loss, ref)

    # Ragged / non-lane-aligned shape exercises the pad + mask path.
    outputs2 = jax.random.normal(k3, (3, 5, 7), dtype=jnp.float32)
    targets2 = (jax.random.uniform(k4, (3, 5, 7)) > 0.5).astype(jnp.float32)
    loss2 = jax.block_until_ready(iou_loss(outputs2, targets2))
    ref2 = _iou_loss_ref(outputs2, targets2)
    assert jnp.allclose(loss2, ref2, atol=1e-5, rtol=1e-5), (loss2, ref2)

    print("KERNEL_OK")
</pallas_src>

<mosaic_0001>
module attributes {stable_mosaic.version = 11 : i64} {
  func.func @_iou_kernel(%arg0: i32, %arg1: i32, %arg2: memref<16x128xf32, #tpu.memory_space<vmem>>, %arg3: memref<16x128xf32, #tpu.memory_space<vmem>>, %arg4: memref<1x3x8x128xf32, #tpu.memory_space<vmem>>) attributes {dimension_semantics = [#tpu.dimension_semantics<parallel>, #tpu.dimension_semantics<arbitrary>], iteration_bounds = array<i64: 2, 1>, scalar_prefetch = 0 : i64, scratch_operands = 0 : i64, tpu.core_type = #tpu.core_type<tc>, window_params = [{transform_indices = @transform_0, window_bounds = array<i64: 16, 128>}, {transform_indices = @transform_1, window_bounds = array<i64: 16, 128>}, {transform_indices = @transform_2, window_bounds = array<i64: 1, 3, 8, 128>}]} {
    %c0_i32 = arith.constant 0 : i32
    %0 = arith.cmpi eq, %arg1, %c0_i32 : i32
    %1 = arith.extui %0 : i1 to i32
    %c0_i32_0 = arith.constant 0 : i32
    %2 = arith.cmpi ne, %1, %c0_i32_0 : i32
    scf.if %2 {
      %cst_34 = arith.constant 0.000000e+00 : f32
      %47 = vector.broadcast %cst_34 : f32 to vector<1x3x8x128xf32>
      %c0_35 = arith.constant 0 : index
      %c0_36 = arith.constant 0 : index
      %c0_37 = arith.constant 0 : index
      %c0_38 = arith.constant 0 : index
      %48 = vector.load %arg4[%c0_35, %c0_36, %c0_37, %c0_38] : memref<1x3x8x128xf32, #tpu.memory_space<vmem>>, vector<1x3x8x128xf32>
      tpu.vector_store %arg4[%c0_35, %c0_36, %c0_37, %c0_38], %47 {strides = array<i32>} : memref<1x3x8x128xf32, #tpu.memory_space<vmem>>, vector<1x3x8x128xf32>,
    } else {
    }
    %c0 = arith.constant 0 : index
    %c0_1 = arith.constant 0 : index
    %3 = vector.load %arg2[%c0, %c0_1] : memref<16x128xf32, #tpu.memory_space<vmem>>, vector<16x128xf32>
    %cst = arith.constant 0.000000e+00 : f32
    %4 = vector.broadcast %cst : f32 to vector<16x128xf32>
    %5 = arith.cmpf ogt, %3, %4 : vector<16x128xf32>
    %c0_2 = arith.constant 0 : index
    %c0_3 = arith.constant 0 : index
    %6 = vector.load %arg3[%c0_2, %c0_3] : memref<16x128xf32, #tpu.memory_space<vmem>>, vector<16x128xf32>
    %c1_i32 = arith.constant 1 : i32
    %7 = arith.muli %arg0, %c1_i32 : i32
    %8 = arith.addi %7, %arg1 : i32
    %9 = tpu.iota {dimensions = array<i32: 0>} : vector<16x128xi32>
    %c16_i32 = arith.constant 16 : i32
    %10 = arith.muli %8, %c16_i32 : i32
    %11 = vector.broadcast %10 : i32 to vector<16x128xi32>
    %12 = arith.addi %11, %9 : vector<16x128xi32>
    %c16_i32_4 = arith.constant 16 : i32
    %13 = vector.broadcast %c16_i32_4 : i32 to vector<16x128xi32>
    %14 = arith.cmpi slt, %12, %13 : vector<16x128xi32>
    %cst_5 = arith.constant 0.000000e+00 : f32
    %15 = vector.broadcast %cst_5 : f32 to vector<16x128xf32>
    %16 = arith.select %14, %6, %15 : vector<16x128xi1>, vector<16x128xf32>
    %17 = arith.andi %5, %14 : vector<16x128xi1>
    %cst_6 = arith.constant 1.000000e+00 : f32
    %cst_7 = arith.constant 0.000000e+00 : f32
    %18 = vector.broadcast %cst_6 : f32 to vector<16x128xf32>
    %19 = vector.broadcast %cst_7 : f32 to vector<16x128xf32>
    %20 = arith.select %17, %18, %19 : vector<16x128xi1>, vector<16x128xf32>
    %cst_8 = arith.constant 0.000000e+00 : f32
    %21 = vector.broadcast %cst_8 : f32 to vector<16x128xf32>
    %22 = arith.select %5, %16, %21 : vector<16x128xi1>, vector<16x128xf32>
    %c0_9 = arith.constant 0 : index
    %c0_10 = arith.constant 0 : index
    %c0_11 = arith.constant 0 : index
    %c0_12 = arith.constant 0 : index
    %23 = vector.load %arg4[%c0_9, %c0_10, %c0_11, %c0_12] : memref<1x3x8x128xf32, #tpu.memory_space<vmem>>, vector<1x1x8x128xf32>
    %24 = vector.shape_cast %23 : vector<1x1x8x128xf32> to vector<8x128xf32>
    %25 = vector.shape_cast %22 : vector<16x128xf32> to vector<2x8x128xf32>
    %cst_13 = arith.constant dense<0.000000e+00> : vector<8x128xf32>
    %26 = vector.multi_reduction <add>, %25, %cst_13 [0] : vector<2x8x128xf32> to vector<8x128xf32>
    %27 = arith.addf %24, %26 : vector<8x128xf32>
    %c0_14 = arith.constant 0 : index
    %c0_15 = arith.constant 0 : index
    %c0_16 = arith.constant 0 : index
    %c0_17 = arith.constant 0 : index
    %28 = vector.load %arg4[%c0_14, %c0_15, %c0_16, %c0_17] : memref<1x3x8x128xf32, #tpu.memory_space<vmem>>, vector<1x1x8x128xf32>
    %29 = vector.shape_cast %28 : vector<1x1x8x128xf32> to vector<8x128xf32>
    %30 = vector.shape_cast %27 : vector<8x128xf32> to vector<1x1x8x128xf32>
    tpu.vector_store %arg4[%c0_14, %c0_15, %c0_16, %c0_17], %30 {strides = array<i32>} : memref<1x3x8x128xf32, #tpu.memory_space<vmem>>, vector<1x1x8x128xf32>,
    %c0_18 = arith.constant 0 : index
    %c1 = arith.constant 1 : index
    %c0_19 = arith.constant 0 : index
    %c0_20 = arith.constant 0 : index
    %31 = vector.load %arg4[%c0_18, %c1, %c0_19, %c0_20] : memref<1x3x8x128xf32, #tpu.memory_space<vmem>>, vector<1x1x8x128xf32>
    %32 = vector.shape_cast %31 : vector<1x1x8x128xf32> to vector<8x128xf32>
    %33 = vector.shape_cast %20 : vector<16x128xf32> to vector<2x8x128xf32>
    %cst_21 = arith.constant dense<0.000000e+00> : vector<8x128xf32>
    %34 = vector.multi_reduction <add>, %33, %cst_21 [0] : vector<2x8x128xf32> to vector<8x128xf32>
    %35 = arith.addf %32, %34 : vector<8x128xf32>
    %c0_22 = arith.constant 0 : index
    %c1_23 = arith.constant 1 : index
    %c0_24 = arith.constant 0 : index
    %c0_25 = arith.constant 0 : index
    %36 = vector.load %arg4[%c0_22, %c1_23, %c0_24, %c0_25] : memref<1x3x8x128xf32, #tpu.memory_space<vmem>>, vector<1x1x8x128xf32>
    %37 = vector.shape_cast %36 : vector<1x1x8x128xf32> to vector<8x128xf32>
    %38 = vector.shape_cast %35 : vector<8x128xf32> to vector<1x1x8x128xf32>
    tpu.vector_store %arg4[%c0_22, %c1_23, %c0_24, %c0_25], %38 {strides = array<i32>} : memref<1x3x8x128xf32, #tpu.memory_space<vmem>>, vector<1x1x8x128xf32>,
    %c0_26 = arith.constant 0 : index
    %c2 = arith.constant 2 : index
    %c0_27 = arith.constant 0 : index
    %c0_28 = arith.constant 0 : index
    %39 = vector.load %arg4[%c0_26, %c2, %c0_27, %c0_28] : memref<1x3x8x128xf32, #tpu.memory_space<vmem>>, vector<1x1x8x128xf32>
    %40 = vector.shape_cast %39 : vector<1x1x8x128xf32> to vector<8x128xf32>
    %41 = vector.shape_cast %16 : vector<16x128xf32> to vector<2x8x128xf32>
    %cst_29 = arith.constant dense<0.000000e+00> : vector<8x128xf32>
    %42 = vector.multi_reduction <add>, %41, %cst_29 [0] : vector<2x8x128xf32> to vector<8x128xf32>
    %43 = arith.addf %40, %42 : vector<8x128xf32>
    %c0_30 = arith.constant 0 : index
    %c2_31 = arith.constant 2 : index
    %c0_32 = arith.constant 0 : index
    %c0_33 = arith.constant 0 : index
    %44 = vector.load %arg4[%c0_30, %c2_31, %c0_32, %c0_33] : memref<1x3x8x128xf32, #tpu.memory_space<vmem>>, vector<1x1x8x128xf32>
    %45 = vector.shape_cast %44 : vector<1x1x8x128xf32> to vector<8x128xf32>
    %46 = vector.shape_cast %43 : vector<8x128xf32> to vector<1x1x8x128xf32>
    tpu.vector_store %arg4[%c0_30, %c2_31, %c0_32, %c0_33], %46 {strides = array<i32>} : memref<1x3x8x128xf32, #tpu.memory_space<vmem>>, vector<1x1x8x128xf32>,
    return
  }
  func.func @transform_0(%arg0: i32, %arg1: i32) -> (i32, i32) {
    %c1_i32 = arith.constant 1 : i32
    %0 = arith.muli %arg0, %c1_i32 : i32
    %1 = arith.addi %0, %arg1 : i32
    %c0_i32 = arith.constant 0 : i32
    %2 = arith.minsi %1, %c0_i32 : i32
    %c0_i32_0 = arith.constant 0 : i32
    %c0_i32_1 = arith.constant 0 : i32
    return %2, %c0_i32_0 : i32, i32
  }
  func.func @transform_1(%arg0: i32, %arg1: i32) -> (i32, i32) {
    %c1_i32 = arith.constant 1 : i32
    %0 = arith.muli %arg0, %c1_i32 : i32
    %1 = arith.addi %0, %arg1 : i32
    %c0_i32 = arith.constant 0 : i32
    %2 = arith.minsi %1, %c0_i32 : i32
    %c0_i32_0 = arith.constant 0 : i32
    %c0_i32_1 = arith.constant 0 : i32
    return %2, %c0_i32_0 : i32, i32
  }
  func.func @transform_2(%arg0: i32, %arg1: i32) -> (i32, i32, i32, i32) {
    %c0_i32 = arith.constant 0 : i32
    %c0_i32_0 = arith.constant 0 : i32
    %c0_i32_1 = arith.constant 0 : i32
    %c0_i32_2 = arith.constant 0 : i32
    return %arg0, %c0_i32, %c0_i32_0, %c0_i32_1 : i32, i32, i32, i32
  }
}

</mosaic_0001>

<llo_original>
// kernel: tpu_custom_call.1
$region0: #{tpu_custom_call.1}
  #allocation0 [shape = 'u32[]', space=smem, size = 0x4, offset = 0x4, fixed_abs, tag = 'smem constant byte address 0x4 - core index']
  #allocation1 [shape = 'u32[72,128]{1,0:T(1,128)}', space=vmem, size = 0x9000, scoped, tag = 'internal scratch']
  %s0 = inlined_call_operand.hbm [shape: f32[16,128], index: 0, kind: input, shape index: {}]
  %s1 = inlined_call_operand.hbm [shape: f32[16,128], index: 1, kind: input, shape index: {}]
  %s2 = inlined_call_operand.hbm [shape: f32[2,3,8,128], index: 2, kind: output, shape index: {}]
  %s3 = sld [smem:[#allocation0]]
  $region53: #{tpu_custom_call.1} parent=0
    _
  %s5 = ssub.s32 1, %s3
  %s6 = scalar_select 0, %s5, %s3
  $region1: #{tpu_custom_call.1} parent=0
    #allocation2 [shape = 'u8[16384]{0}', space=vmem, size = 0x4000, scoped, tag = 'input window, operand 0']
    #allocation3 [shape = 's32[2]{0}', space=sflag, size = 0x8, scoped, tag = 'scoped memory for tpu_custom_call.1']
    #allocation4 [shape = 's32[2]{0}', space=sflag, size = 0x8, scoped, tag = 'scoped memory for tpu_custom_call.1']
    #allocation5 [shape = 'u8[16384]{0}', space=vmem, size = 0x4000, scoped, tag = 'input window, operand 1']
    #allocation6 [shape = 's32[2]{0}', space=sflag, size = 0x8, scoped, tag = 'scoped memory for tpu_custom_call.1']
    #allocation7 [shape = 'u8[24576]{0}', space=vmem, size = 0x6000, scoped, tag = 'output window, operand 0']
    %7 = vsyncpa [#allocation3], 0
    %s8 = scalar_lea.sflag [#allocation3], 1
    %9 = vsyncpa %s8, 0
    %10 = vsyncpa [#allocation6], 0
    %s11 = scalar_lea.sflag [#allocation6], 1
    %12 = vsyncpa %s11, 0
    %13 = vsyncpa [#allocation4], 0
    %s14 = scalar_lea.sflag [#allocation4], 1
    %15 = vsyncpa %s14, 0
    loop: start=0, step=1, limit=4
    $region2: #{tpu_custom_call.1} parent=1 // loop_pre_header
      _
    $region3: #{tpu_custom_call.1} parent=1 // loop_header
      %s17 = sphi 0, %s21
      %p18 = scmp.ge.s32.totalorder %s17, 4
      %s24 = sphi 0, %s36
      %s25 = sphi 0, %s32
      %s26 = sphi 0, %s24
      %s27 = sphi 0, %s25
      %s28 = sphi 0, %s26
      %s29 = sphi 0, %s27
      %s45 = sphi 0, %s47
      %s48 = sphi 0, %s45
      %s49 = sphi 0, %s48
      %s65 = sphi 0, %s49
      %s77 = sphi 0, %s79
      %s80 = sphi 0, %s77
      %s81 = sphi 0, %s80
      %s97 = sphi 0, %s81
      %s103 = sphi 0, %s105
      %s106 = sphi 0, %s103
      %s107 = sphi 0, %s106
      %s123 = sphi 0, %s107
    $region4: #{tpu_custom_call.1} parent=1 // loop_header_branch
      %20 = sbr.rel (%p18) target = $region8
    $region5: #{tpu_custom_call.1} parent=1 // loop_body
      %s22 = ssub.s32 %s17, 1
      %s23 = ssub.s32 %s17, 2
      %s30 = sadd.s32 1, %s25
      %p31 = scmp.ge.s32.totalorder %s30, 1
      %s32 = scalar_select %p31, 0, %s30
      %s33 = sadd.s32 1, %s24
      %s34 = scalar_select %p31, %s33, %s24
      %p35 = scmp.ge.s32.totalorder %s34, 2
      %s36 = scalar_select %p35, 0, %s34
      %s37 = sadd.s32 %s24, %s25
      %p38 = scmp.lt.s32.totalorder %s37, 0
      %s39 = scalar_select %p38, %s37, 0
      %s40 = sadd.s32 %s36, %s32
      %p41 = scmp.lt.s32.totalorder %s40, 0
      %s42 = scalar_select %p41, %s40, 0
      %s43 = ssub.s32 %s39, %s42
      %p44 = scmp.eq.s32.totalorder %s43, 0
      %s46 = sadd.s32 %s45, 1
      %s47 = scalar_select %p44, %s45, %s46
      %p50 = pneg %p44
      %p51 = scmp.eq.s32.totalorder %s17, 1
      %p52 = por %p50, %p51
      %p53 = scmp.ne.s32.totalorder %s45, %s48
      %p54 = scmp.eq.s32.totalorder %s17, 0
      %p55 = por %p53, %p54
      %p56 = scmp.ne.s32.totalorder %s45, %s48
      %p57 = scmp.eq.s32.totalorder %s22, 1
      %p58 = por %p56, %p57
      %p59 = scmp.ne.s32.totalorder %s48, %s49
      %p60 = scmp.eq.s32.totalorder %s22, 0
      %p61 = por %p59, %p60
      %p62 = scmp.ne.s32.totalorder %s48, %s49
      %p63 = scmp.eq.s32.totalorder %s23, 1
      %p64 = por %p62, %p63
      %p66 = scmp.ne.s32.totalorder %s49, %s65
      %p67 = scmp.eq.s32.totalorder %s23, 0
      %p68 = por %p66, %p67
      %s69 = sadd.s32 %s24, %s25
      %p70 = scmp.lt.s32.totalorder %s69, 0
      %s71 = scalar_select %p70, %s69, 0
      %s72 = sadd.s32 %s36, %s32
      %p73 = scmp.lt.s32.totalorder %s72, 0
      %s74 = scalar_select %p73, %s72, 0
      %s75 = ssub.s32 %s71, %s74
      %p76 = scmp.eq.s32.totalorder %s75, 0
      %s78 = sadd.s32 %s77, 1
      %s79 = scalar_select %p76, %s77, %s78
      %p82 = pneg %p76
      %p83 = scmp.eq.s32.totalorder %s17, 1
      %p84 = por %p82, %p83
      %p85 = scmp.ne.s32.totalorder %s77, %s80
      %p86 = scmp.eq.s32.totalorder %s17, 0
      %p87 = por %p85, %p86
      %p88 = scmp.ne.s32.totalorder %s77, %s80
      %p89 = scmp.eq.s32.totalorder %s22, 1
      %p90 = por %p88, %p89
      %p91 = scmp.ne.s32.totalorder %s80, %s81
      %p92 = scmp.eq.s32.totalorder %s22, 0
      %p93 = por %p91, %p92
      %p94 = scmp.ne.s32.totalorder %s80, %s81
      %p95 = scmp.eq.s32.totalorder %s23, 1
      %p96 = por %p94, %p95
      %p98 = scmp.ne.s32.totalorder %s81, %s97
      %p99 = scmp.eq.s32.totalorder %s23, 0
      %p100 = por %p98, %p99
      %s101 = ssub.s32 %s24, %s36
      %p102 = scmp.eq.s32.totalorder %s101, 0
      %s104 = sadd.s32 %s103, 1
      %s105 = scalar_select %p102, %s103, %s104
      %p108 = pneg %p102
      %p109 = scmp.eq.s32.totalorder %s17, 1
      %p110 = por %p108, %p109
      %p111 = scmp.ne.s32.totalorder %s103, %s106
      %p112 = scmp.eq.s32.totalorder %s17, 0
      %p113 = por %p111, %p112
      %p114 = scmp.ne.s32.totalorder %s103, %s106
      %p115 = scmp.eq.s32.totalorder %s22, 1
      %p116 = por %p114, %p115
      %p117 = scmp.ne.s32.totalorder %s106, %s107
      %p118 = scmp.eq.s32.totalorder %s22, 0
      %p119 = por %p117, %p118
      %p120 = scmp.ne.s32.totalorder %s106, %s107
      %p121 = scmp.eq.s32.totalorder %s23, 1
      %p122 = por %p120, %p121
      %p124 = scmp.ne.s32.totalorder %s107, %s123
      %p125 = scmp.eq.s32.totalorder %s23, 0
      %p126 = por %p124, %p125
      %p127 = scmp.le.s32.totalorder 1, %s17
      %p128 = scmp.lt.s32.totalorder %s17, 3
      %p129 = pnand %p127, %p128
      %p130 = pneg %p129
      // Predicated region
      $region9: #{tpu_custom_call.1} parent=5 // pred_check
        _
      $region10: #{tpu_custom_call.1} parent=5 // pred_check_branch
        %132 = sbr.rel (%p129) target = $region12
      $region11: #{tpu_custom_call.1} parent=5 // pred_region
        %s133 = ssub.s32 %s17, 1
      $region12: #{tpu_custom_call.1} parent=5 // pred_fallthru
        _
      %p134 = scmp.lt.s32.totalorder %s17, 2
      // Predicated region
      $region13: #{tpu_custom_call.1} parent=5 // pred_check
        %p135 = pneg %p134
      $region14: #{tpu_custom_call.1} parent=5 // pred_check_branch
        %137 = sbr.rel (%p135) target = $region16
      $region15: #{tpu_custom_call.1} parent=5 // pred_region
        // Predicated region
        $region17: #{tpu_custom_call.1} parent=15 // pred_check
          %p138 = pneg %p55
        $region18: #{tpu_custom_call.1} parent=15 // pred_check_branch
          %140 = sbr.rel (%p138) target = $region20
        $region19: #{tpu_custom_call.1} parent=15 // pred_region
          %s141 = sand.u32 %s45, 1
          %s142 = scalar_lea.sflag [#allocation3], %s141
          %s143 = sand.u32 %s45, 1
          %s144 = smul.addr %s143, 16
          %s145 = scalar_lea.vmem [#allocation2], %s144
          %s146 = sadd.s32 %s24, %s25
          %p147 = scmp.lt.s32.totalorder %s146, 0
          %s148 = scalar_select %p147, %s146, 0
          %s149 = smul.u32 2, %s148
          %151 = vsyncadd %s142, 0
          %s152 = smul.addr %s149, 8
          %s153 = scalar_lea.hbm %s0, %s152
          %s154 = sshll.u32 %s153, 4
          %s155 = int_to_ptr.hbm [resolvable:$true] %s154
          %s156 = sshll.u32 %s145, 4
          %s157 = int_to_ptr.vmem [resolvable:$true] %s156
          %162 = dma.hbm_to_vmem [thread:$0]  %s155, 256, %s157, %s142, 128, 128, 8
        $region20: #{tpu_custom_call.1} parent=15 // pred_fallthru
          _
        // Predicated region
        $region21: #{tpu_custom_call.1} parent=15 // pred_check
          %p163 = pneg %p87
        $region22: #{tpu_custom_call.1} parent=15 // pred_check_branch
          %165 = sbr.rel (%p163) target = $region24
        $region23: #{tpu_custom_call.1} parent=15 // pred_region
          %s166 = sand.u32 %s77, 1
          %s167 = scalar_lea.sflag [#allocation6], %s166
          %s168 = sand.u32 %s77, 1
          %s169 = smul.addr %s168, 16
          %s170 = scalar_lea.vmem [#allocation5], %s169
          %s171 = sadd.s32 %s24, %s25
          %p172 = scmp.lt.s32.totalorder %s171, 0
          %s173 = scalar_select %p172, %s171, 0
          %s174 = smul.u32 2, %s173
          %176 = vsyncadd %s167, 0
          %s177 = smul.addr %s174, 8
          %s178 = scalar_lea.hbm %s1, %s177
          %s179 = sshll.u32 %s178, 4
          %s180 = int_to_ptr.hbm [resolvable:$true] %s179
          %s181 = sshll.u32 %s170, 4
          %s182 = int_to_ptr.vmem [resolvable:$true] %s181
          %187 = dma.hbm_to_vmem [thread:$0]  %s180, 256, %s182, %s167, 128, 128, 8
        $region24: #{tpu_custom_call.1} parent=15 // pred_fallthru
          _
      $region16: #{tpu_custom_call.1} parent=5 // pred_fallthru
        _
      %p188 = scmp.le.s32.totalorder 1, %s17
      %p189 = scmp.lt.s32.totalorder %s17, 3
      %p190 = pnand %p188, %p189
      %p191 = pneg %p190
      // Predicated region
      $region25: #{tpu_custom_call.1} parent=5 // pred_check
        _
      $region26: #{tpu_custom_call.1} parent=5 // pred_check_branch
        %193 = sbr.rel (%p190) target = $region28
      $region27: #{tpu_custom_call.1} parent=5 // pred_region
        %s194 = ssub.s32 %s17, 1
        %s195 = sand.u32 %s48, 1
        %s196 = scalar_lea.sflag [#allocation3], %s195
        %s197 = sand.u32 %s48, 1
        %s198 = smul.addr %s197, 16
        %s199 = scalar_lea.vmem [#allocation2], %s198
        // Predicated region
        $region29: #{tpu_custom_call.1} parent=27 // pred_check
          %p200 = pneg %p61
        $region30: #{tpu_custom_call.1} parent=27 // pred_check_branch
          %202 = sbr.rel (%p200) target = $region32
        $region31: #{tpu_custom_call.1} parent=27 // pred_region
          %204 = dma.done %s196, 256
        $region32: #{tpu_custom_call.1} parent=27 // pred_fallthru
          _
        %s205 = sand.u32 %s80, 1
        %s206 = scalar_lea.sflag [#allocation6], %s205
        %s207 = sand.u32 %s80, 1
        %s208 = smul.addr %s207, 16
        %s209 = scalar_lea.vmem [#allocation5], %s208
        // Predicated region
        $region33: #{tpu_custom_call.1} parent=27 // pred_check
          %p210 = pneg %p93
        $region34: #{tpu_custom_call.1} parent=27 // pred_check_branch
          %212 = sbr.rel (%p210) target = $region36
        $region35: #{tpu_custom_call.1} parent=27 // pred_region
          %214 = dma.done %s206, 256
        $region36: #{tpu_custom_call.1} parent=27 // pred_fallthru
          _
        %s215 = sand.u32 %s48, 1
        %s216 = scalar_lea.sflag [#allocation3], %s215
        %s217 = sand.u32 %s48, 1
        %s218 = smul.addr %s217, 16
        %s219 = scalar_lea.vmem [#allocation2], %s218
        %p220 = pneg %p61
        %p221 = pneg %p58
        %s222 = sand.u32 %s80, 1
        %s223 = scalar_lea.sflag [#allocation6], %s222
        %s224 = sand.u32 %s80, 1
        %s225 = smul.addr %s224, 16
        %s226 = scalar_lea.vmem [#allocation5], %s225
        %p227 = pneg %p93
        %p228 = pneg %p90
        %p229 = pneg %p119
        %p230 = pneg %p116
        %s231 = sand.u32 %s106, 1
        %s232 = scalar_lea.sflag [#allocation4], %s231
        %s233 = sand.u32 %s106, 1
        %s234 = smul.addr %s233, 24
        %s235 = scalar_lea.vmem [#allocation7], %s234
        %s236 = sadd.s32 %s26, %s27
        %p237 = scmp.lt.s32.totalorder %s236, 0
        %s238 = scalar_select %p237, %s236, 0
        %s239 = smul.u32 2, %s238
        %s240 = sadd.s32 %s26, %s27
        %p241 = scmp.lt.s32.totalorder %s240, 0
        %s242 = scalar_select %p241, %s240, 0
        %s243 = smul.u32 2, %s242
        %p244 = scmp.eq.s32.totalorder %s27, 0
        // Predicated region
        $region37: #{tpu_custom_call.1} parent=27 // pred_check
          %p245 = pneg %p244
        $region38: #{tpu_custom_call.1} parent=27 // pred_check_branch
          %247 = sbr.rel (%p245) target = $region40
        $region39: #{tpu_custom_call.1} parent=27 // pred_region
          %248 = vst [vmem:[%s235] sm:$0xff] 0.0
          %249 = vst [vmem:[%s235 + $0x8] sm:$0xff] 0.0
          %250 = vst [vmem:[%s235 + $0x10] sm:$0xff] 0.0
        $region40: #{tpu_custom_call.1} parent=27 // pred_fallthru
          _
        %v251 = vld [vmem:[%s199] sm:$0xff]
        %v252 = vld [vmem:[%s199 + $0x8] sm:$0xff]
        %vm253 = vcmp.gt.f32.partialorder %v251, 0.0
        %vm254 = vcmp.gt.f32.partialorder %v252, 0.0
        %v255 = vld [vmem:[%s209] sm:$0xff]
        %v256 = vld [vmem:[%s209 + $0x8] sm:$0xff]
        %s257 = sadd.s32 %s26, %s27
        %v258 = vlaneseq
        %v259 = vshrl.u32 %v258, 7
        %v260 = vadd.s32 %v259, 8
        %s261 = smul.u32 %s257, 16
        %v262 = vstv %s261
        %v263 = vadd.s32 %v262, %v259
        %v264 = vadd.s32 %v262, %v260
        %vm265 = vcmp.lt.s32.totalorder %v263, 16
        %vm266 = vcmp.lt.s32.totalorder %v264, 16
        %v267 = vsel %vm265, %v255, 0.0
        %v268 = vsel %vm266, %v256, 0.0
        %vm269 = vmand %vm253, %vm265
        %vm270 = vmand %vm254, %vm266
        %v271 = vsel %vm269, 1.0, 0.0
        %v272 = vsel %vm270, 1.0, 0.0
        %v273 = vsel %vm253, %v267, 0.0
        %v274 = vsel %vm254, %v268, 0.0
        %v275 = vld [vmem:[%s235] sm:$0xff]
        %v276 = vadd.f32 %v273, %v274
        %v277 = vadd.f32 %v275, %v276
        %278 = vst [vmem:[%s235] sm:$0xff] %v277
        %s279 = scalar_lea.vmem %s235, 8 [#allocation7]
        %v280 = vld [vmem:[%s279] sm:$0xff]
        %v281 = vadd.f32 %v271, %v272
        %v282 = vadd.f32 %v280, %v281
        %283 = vst [vmem:[%s279] sm:$0xff] %v282
        %s284 = scalar_lea.vmem %s235, 16 [#allocation7]
        %v285 = vld [vmem:[%s284] sm:$0xff]
        %v286 = vadd.f32 %v267, %v268
        %v287 = vadd.f32 %v285, %v286
        %288 = vst [vmem:[%s284] sm:$0xff] %v287
        %s289 = sand.u32 %s106, 1
        %s290 = scalar_lea.sflag [#allocation4], %s289
        %s291 = sand.u32 %s106, 1
        %s292 = smul.addr %s291, 24
        %s293 = scalar_lea.vmem [#allocation7], %s292
        // Predicated region
        $region41: #{tpu_custom_call.1} parent=27 // pred_check
          %p294 = pneg %p116
        $region42: #{tpu_custom_call.1} parent=27 // pred_check_branch
          %296 = sbr.rel (%p294) target = $region44
        $region43: #{tpu_custom_call.1} parent=27 // pred_region
          %298 = vsyncadd %s290, 0
          %s299 = smul.addr %s26, 3
          %s300 = smul.addr %s299, 8
          %s301 = scalar_lea.hbm %s2, %s300
          %s302 = sshll.u32 %s293, 4
          %s303 = int_to_ptr.vmem [resolvable:$true] %s302
          %s304 = sshll.u32 %s301, 4
          %s305 = int_to_ptr.hbm [resolvable:$true] %s304
          %310 = dma.vmem_to_hbm [thread:$0]  %s303, 384, %s305, %s290, 128, 128, 8
        $region44: #{tpu_custom_call.1} parent=27 // pred_fallthru
          _
      $region28: #{tpu_custom_call.1} parent=5 // pred_fallthru
        _
      %p311 = scmp.le.s32.totalorder 2, %s17
      // Predicated region
      $region45: #{tpu_custom_call.1} parent=5 // pred_check
        %p312 = pneg %p311
      $region46: #{tpu_custom_call.1} parent=5 // pred_check_branch
        %314 = sbr.rel (%p312) target = $region48
      $region47: #{tpu_custom_call.1} parent=5 // pred_region
        %s315 = ssub.s32 %s17, 2
        // Predicated region
        $region49: #{tpu_custom_call.1} parent=47 // pred_check
          %p316 = pneg %p122
        $region50: #{tpu_custom_call.1} parent=47 // pred_check_branch
          %318 = sbr.rel (%p316) target = $region52
        $region51: #{tpu_custom_call.1} parent=47 // pred_region
          %s319 = sand.u32 %s107, 1
          %s320 = scalar_lea.sflag [#allocation4], %s319
          %s321 = sand.u32 %s107, 1
          %s322 = smul.addr %s321, 24
          %s323 = scalar_lea.vmem [#allocation7], %s322
          %325 = dma.done %s320, 384
        $region52: #{tpu_custom_call.1} parent=47 // pred_fallthru
          _
      $region48: #{tpu_custom_call.1} parent=5 // pred_fallthru
        _
    $region6: #{tpu_custom_call.1} parent=1 // loop_footer
      %s21 = sadd.s32 1, %s17
    $region7: #{tpu_custom_call.1} parent=1 // loop_footer_branch
      %16 = sbr.rel target = $region3
    $region8: #{tpu_custom_call.1} parent=1 // loop_exit
      _
    %326 = vsyncpa [#allocation3], 1
    %s327 = scalar_lea.sflag [#allocation3], 1
    %328 = vsyncpa %s327, 1
    %329 = vsyncpa [#allocation6], 1
    %s330 = scalar_lea.sflag [#allocation6], 1
    %331 = vsyncpa %s330, 1
    %332 = vsyncpa [#allocation4], 1
    %s333 = scalar_lea.sflag [#allocation4], 1
    %334 = vsyncpa %s333, 1

</llo_original>
